<compile_context>
chip_gen: v7x
topology: tpu7x:2x2x1
jax: 0.10.0
libtpu: 0.0.40
codegen_flags: <defaults>
</compile_context>

<pallas_src>
import functools

import numpy as np
import jax
import jax.numpy as jnp
from jax.experimental import pallas as pl
from jax.experimental.pallas import tpu as pltpu


def _round_up(x, m):
    return (x + m - 1) // m * m


def _full_spec(shape):
    # block == full array, constant index_map -> buffer stays VMEM-resident
    # across the batch grid (no re-DMA per step).
    nd = len(shape)
    return pl.BlockSpec(shape, lambda *_: (0,) * nd)


def _fused_kernel(q_ref, w1_ref, b1_ref, g_ref, beta_ref, w2_ref, b2_ref,
                  w3s_ref, b3s_ref, gram_ref, m_ref,
                  *, qdim, qq_pad, compute_dtype, vpu_first_layer):
    """q -> LNMLP -> out Linear (scatter folded) -> M = L @ L^T (flattened)."""
    f32 = jnp.float32
    cdt = compute_dtype

    def c(x):
        return x if x.dtype == cdt else x.astype(cdt)

    q = q_ref[...]

    # --- LNMLP hidden layer: Linear -> LayerNorm(eps=1e-5) -> ReLU ---
    if vpu_first_layer:
        # K = qdim is tiny: qdim broadcast-FMAs on the VPU beat an MXU push
        # with terrible utilisation (esp. v5e/v6e MRF pop latency).
        h = b1_ref[...].astype(f32)
        for j in range(qdim):
            h = h + q[:, j:j + 1].astype(f32) * w1_ref[j:j + 1, :].astype(f32)
    else:
        h = jnp.dot(c(q), c(w1_ref[...]), preferred_element_type=f32) + b1_ref[...]
    mu = jnp.mean(h, axis=-1, keepdims=True)                   # LN stats in f32
    var = jnp.mean(jnp.square(h - mu), axis=-1, keepdims=True)
    h = (h - mu) * jax.lax.rsqrt(var + 1e-5)
    h = h * g_ref[...] + beta_ref[...]
    h = jnp.maximum(h, 0.0)

    # --- LNMLP output Linear (the shared embedding) ---
    e = jnp.dot(c(h), c(w2_ref[...]), preferred_element_type=f32) + b2_ref[...]

    # --- self.out Linear with lower-tri scatter + diag bias folded in:
    #     lflat[b, i*qdim + j] = L[b, i, j]  (row-major, padded lanes are 0)
    lflat = jnp.dot(c(e), c(w3s_ref[...]), preferred_element_type=f32) + b3s_ref[...]

    # --- M = L @ L^T:
    #     prod_s[b, i*qdim+j] = L[b,i,j] * L[b,i+s,j]   (XLU roll + VPU mult)
    #     M_flat = concat_s(prod_s) @ gram              (one constant MXU matmul
    #                                                    = per-row sums + symmetric scatter)
    # Wrap-around lanes from the roll only land on all-zero rows of `gram`.
    prods = [lflat * lflat]                               # s = 0 (diagonal)
    for s in range(1, qdim):
        shifted = pltpu.roll(lflat, shift=qq_pad - s * qdim, axis=1)
        prods.append(lflat * shifted)
    prod = jnp.concatenate(prods, axis=-1)                # (BT, qdim * QQ_pad)
    m_ref[...] = jnp.dot(prod, gram_ref[...], preferred_element_type=f32)


def _fold_out_layer(W3, b3, qdim, bias, qq_pad):
    """Fold the lower-triangular scatter + diagonal bias into the out-Linear.

    Bit-exact: every output column is a pure copy of one W3 column (or zero).
    """
    W3 = np.asarray(W3, np.float32)                    # (h1, P)
    b3 = np.asarray(b3, np.float32).reshape(-1)        # (P,)
    h1 = W3.shape[0]
    W3s = np.zeros((h1, qq_pad), np.float32)
    b3s = np.zeros((1, qq_pad), np.float32)
    for t in range(qdim):                              # diagonal params first
        col = t * qdim + t
        W3s[:, col] = W3[:, t]
        b3s[0, col] = b3[t] + bias                     # pos_enforce = identity, +bias
    ii, jj = np.tril_indices(qdim, k=-1)               # strict lower, row-major
    for t in range(len(ii)):
        col = ii[t] * qdim + jj[t]
        W3s[:, col] = W3[:, qdim + t]
        b3s[0, col] = b3[qdim + t]
    return jnp.asarray(W3s), jnp.asarray(b3s)


def _gram_scatter_matrix(qdim, qq_pad):
    """Constant 0/1 matrix: concat_s(lflat * roll_s(lflat)) @ G == flat(L @ L^T)."""
    G = np.zeros((qdim * qq_pad, qq_pad), np.float32)
    for s in range(qdim):
        for i in range(qdim - s):
            k = i + s
            for j in range(qdim):
                row = s * qq_pad + i * qdim + j
                G[row, i * qdim + k] = 1.0
                if s > 0:
                    G[row, k * qdim + i] = 1.0         # symmetric entry
    return jnp.asarray(G)


def init_params(key, qdim, hidden_sizes, dtype=jnp.float32):
    h0 = hidden_sizes[0]           # LNMLP hidden width
    h1 = hidden_sizes[-1]          # embedding width (LNMLP output)
    p = qdim * (qdim + 1) // 2
    k1, k2, k3 = jax.random.split(key, 3)
    W1 = (jax.random.normal(k1, (qdim, h0), jnp.float32) / np.sqrt(qdim)).astype(dtype)
    b1 = jnp.zeros((1, h0), dtype)
    g = jnp.ones((1, h0), dtype)        # LayerNorm weight
    beta = jnp.zeros((1, h0), dtype)    # LayerNorm bias
    W2 = (jax.random.normal(k2, (h0, h1), jnp.float32) / np.sqrt(h0)).astype(dtype)
    b2 = jnp.zeros((1, h1), dtype)
    W3 = (jax.random.normal(k3, (h1, p), jnp.float32) / np.sqrt(h1)).astype(dtype)
    b3 = jnp.zeros((1, p), dtype)
    return (W1, b1, g, beta, W2, b2, W3, b3)


def cholesky_mm_net(q, params, qdim, bias=2.0, compute_dtype=jnp.float32):
    if qdim <= 1:
        # TODO(synk): qdim == 1 branch of CholeskyMMNet.forward not implemented
        # (the test / typical usage has qdim > 1).
        raise NotImplementedError("qdim must be > 1")

    W1, b1, g, beta, W2, b2, W3, b3 = params
    B = q.shape[0]
    QQ = qdim * qdim
    QQ_pad = _round_up(QQ, 128)        # lane-dense output -> unmasked vst

    # Host-side constant folding (done once; bit-exact column copies).
    W3s, b3s = _fold_out_layer(W3, b3, qdim, bias, QQ_pad)
    gram = _gram_scatter_matrix(qdim, QQ_pad)
    # NOTE: gram is O(qdim * QQ_pad^2) floats (256 KB at qdim=4, ~4 MB at
    # qdim=16).  For very large qdim split it into per-shift matmuls or a
    # banded scatter to stay inside VMEM.

    # Batch tiling: multiple-of-8 sublane tiles, up to 512 rows per grid step
    # to amortise per-step pipeline overhead and fill the 256-row MXU.
    BT = min(512, _round_up(B, 8))
    if B >= 16:
        # Keep >= 2 grid steps so dimension_semantics=("parallel",) can shard
        # the batch across v7x's two TensorCores.
        BT = min(BT, _round_up((B + 1) // 2, 8))
    B_pad = _round_up(B, BT)
    q_pad = jnp.pad(q, ((0, B_pad - B), (0, 0))) if B_pad != B else q

    kernel = functools.partial(
        _fused_kernel, qdim=qdim, qq_pad=QQ_pad, compute_dtype=compute_dtype,
        vpu_first_layer=(qdim <= 8))

    resident = [W1, b1, g, beta, W2, b2, W3s, b3s, gram]
    in_specs = ([pl.BlockSpec((BT, qdim), lambda i: (i, 0))]
                + [_full_spec(a.shape) for a in resident])
    out_spec = pl.BlockSpec((BT, QQ_pad), lambda i: (i, 0))

    m_flat = pl.pallas_call(
        kernel,
        grid=(B_pad // BT,),
        in_specs=in_specs,
        out_specs=out_spec,
        out_shape=jax.ShapeDtypeStruct((B_pad, QQ_pad), jnp.float32),
        compiler_params=pltpu.CompilerParams(
            dimension_semantics=("parallel",),    # batch sharded over both TCs on v7x
            vmem_limit_bytes=48 * 1024 * 1024,    # <= v7x 64 MiB with headroom
        ),
    )(q_pad, *resident)

    # Wrapper-side slice + reshape (pure layout plumbing, no extra kernel).
    return m_flat[:B, :QQ].reshape(B, qdim, qdim)


def reference(q, params, qdim, bias=2.0):
    """Pure-JAX reference mirroring the PyTorch forward."""
    W1, b1, g, beta, W2, b2, W3, b3 = params
    h = q @ W1 + b1
    mu = h.mean(-1, keepdims=True)
    var = ((h - mu) ** 2).mean(-1, keepdims=True)
    h = (h - mu) / jnp.sqrt(var + 1e-5) * g + beta
    h = jnp.maximum(h, 0.0)
    e = h @ W2 + b2
    p = e @ W3 + b3
    B = q.shape[0]
    L = jnp.zeros((B, qdim, qdim), jnp.float32)
    ii, jj = np.tril_indices(qdim, k=-1)
    L = L.at[:, ii, jj].set(p[:, qdim:])
    d = np.arange(qdim)
    L = L.at[:, d, d].set(p[:, :qdim] + bias)    # pos_enforce = identity
    return jnp.einsum('bij,bkj->bik', L, L)


if __name__ == "__main__":
    qdim = 4
    hidden_sizes = [32, 32]
    B = 8

    key = jax.random.PRNGKey(0)
    kq, kp = jax.random.split(key)
    q = jax.random.normal(kq, (B, qdim), jnp.float32)
    params = init_params(kp, qdim, hidden_sizes)

    M = jax.block_until_ready(cholesky_mm_net(q, params, qdim, bias=2.0))
    M_ref = jax.block_until_ready(reference(q, params, qdim, bias=2.0))

    if not np.allclose(np.asarray(M), np.asarray(M_ref), rtol=1e-3, atol=1e-3):
        raise AssertionError("Pallas output does not match reference")

    print("KERNEL_OK")
</pallas_src>

<mosaic_0001>
module attributes {stable_mosaic.version = 11 : i64} {
  func.func @_fused_kernel(%arg0: i32, %arg1: memref<8x4xf32, #tpu.memory_space<vmem>>, %arg2: memref<4x32xf32, #tpu.memory_space<vmem>>, %arg3: memref<1x32xf32, #tpu.memory_space<vmem>>, %arg4: memref<1x32xf32, #tpu.memory_space<vmem>>, %arg5: memref<1x32xf32, #tpu.memory_space<vmem>>, %arg6: memref<32x32xf32, #tpu.memory_space<vmem>>, %arg7: memref<1x32xf32, #tpu.memory_space<vmem>>, %arg8: memref<32x128xf32, #tpu.memory_space<vmem>>, %arg9: memref<1x128xf32, #tpu.memory_space<vmem>>, %arg10: memref<512x128xf32, #tpu.memory_space<vmem>>, %arg11: memref<8x128xf32, #tpu.memory_space<vmem>>) attributes {dimension_semantics = [#tpu.dimension_semantics<parallel>], iteration_bounds = array<i64: 1>, scalar_prefetch = 0 : i64, scratch_operands = 0 : i64, tpu.core_type = #tpu.core_type<tc>, window_params = [{transform_indices = @transform_0, window_bounds = array<i64: 8, 4>}, {pipeline_mode = #tpu.pipeline_mode<synchronous>, transform_indices = @transform_1, window_bounds = array<i64: 4, 32>}, {pipeline_mode = #tpu.pipeline_mode<synchronous>, transform_indices = @transform_2, window_bounds = array<i64: 1, 32>}, {pipeline_mode = #tpu.pipeline_mode<synchronous>, transform_indices = @transform_3, window_bounds = array<i64: 1, 32>}, {pipeline_mode = #tpu.pipeline_mode<synchronous>, transform_indices = @transform_4, window_bounds = array<i64: 1, 32>}, {pipeline_mode = #tpu.pipeline_mode<synchronous>, transform_indices = @transform_5, window_bounds = array<i64: 32, 32>}, {pipeline_mode = #tpu.pipeline_mode<synchronous>, transform_indices = @transform_6, window_bounds = array<i64: 1, 32>}, {pipeline_mode = #tpu.pipeline_mode<synchronous>, transform_indices = @transform_7, window_bounds = array<i64: 32, 128>}, {pipeline_mode = #tpu.pipeline_mode<synchronous>, transform_indices = @transform_8, window_bounds = array<i64: 1, 128>}, {pipeline_mode = #tpu.pipeline_mode<synchronous>, transform_indices = @transform_9, window_bounds = array<i64: 512, 128>}, {transform_indices = @transform_10, window_bounds = array<i64: 8, 128>}]} {
    %c0 = arith.constant 0 : index
    %c0_0 = arith.constant 0 : index
    %0 = vector.load %arg1[%c0, %c0_0] : memref<8x4xf32, #tpu.memory_space<vmem>>, vector<8x4xf32>
    %c0_1 = arith.constant 0 : index
    %c0_2 = arith.constant 0 : index
    %1 = vector.load %arg3[%c0_1, %c0_2] : memref<1x32xf32, #tpu.memory_space<vmem>>, vector<1x32xf32>
    %2 = vector.extract_strided_slice %0 {offsets = [0, 0], sizes = [8, 1], strides = [1, 1]} : vector<8x4xf32> to vector<8x1xf32>
    %c0_3 = arith.constant 0 : index
    %c0_4 = arith.constant 0 : index
    %3 = vector.load %arg2[%c0_3, %c0_4] : memref<4x32xf32, #tpu.memory_space<vmem>>, vector<1x32xf32>
    %4 = vector.broadcast %2 : vector<8x1xf32> to vector<8x32xf32>
    %5 = vector.broadcast %3 : vector<1x32xf32> to vector<8x32xf32>
    %6 = arith.mulf %4, %5 : vector<8x32xf32>
    %7 = vector.broadcast %1 : vector<1x32xf32> to vector<8x32xf32>
    %8 = arith.addf %7, %6 : vector<8x32xf32>
    %9 = vector.extract_strided_slice %0 {offsets = [0, 1], sizes = [8, 1], strides = [1, 1]} : vector<8x4xf32> to vector<8x1xf32>
    %c1 = arith.constant 1 : index
    %c0_5 = arith.constant 0 : index
    %10 = vector.load %arg2[%c1, %c0_5] : memref<4x32xf32, #tpu.memory_space<vmem>>, vector<1x32xf32>
    %11 = vector.broadcast %9 : vector<8x1xf32> to vector<8x32xf32>
    %12 = vector.broadcast %10 : vector<1x32xf32> to vector<8x32xf32>
    %13 = arith.mulf %11, %12 : vector<8x32xf32>
    %14 = arith.addf %8, %13 : vector<8x32xf32>
    %15 = vector.extract_strided_slice %0 {offsets = [0, 2], sizes = [8, 1], strides = [1, 1]} : vector<8x4xf32> to vector<8x1xf32>
    %c2 = arith.constant 2 : index
    %c0_6 = arith.constant 0 : index
    %16 = vector.load %arg2[%c2, %c0_6] : memref<4x32xf32, #tpu.memory_space<vmem>>, vector<1x32xf32>
    %17 = vector.broadcast %15 : vector<8x1xf32> to vector<8x32xf32>
    %18 = vector.broadcast %16 : vector<1x32xf32> to vector<8x32xf32>
    %19 = arith.mulf %17, %18 : vector<8x32xf32>
    %20 = arith.addf %14, %19 : vector<8x32xf32>
    %21 = vector.extract_strided_slice %0 {offsets = [0, 3], sizes = [8, 1], strides = [1, 1]} : vector<8x4xf32> to vector<8x1xf32>
    %c3 = arith.constant 3 : index
    %c0_7 = arith.constant 0 : index
    %22 = vector.load %arg2[%c3, %c0_7] : memref<4x32xf32, #tpu.memory_space<vmem>>, vector<1x32xf32>
    %23 = vector.broadcast %21 : vector<8x1xf32> to vector<8x32xf32>
    %24 = vector.broadcast %22 : vector<1x32xf32> to vector<8x32xf32>
    %25 = arith.mulf %23, %24 : vector<8x32xf32>
    %26 = arith.addf %20, %25 : vector<8x32xf32>
    %cst = arith.constant dense<0.000000e+00> : vector<8xf32>
    %27 = vector.multi_reduction <add>, %26, %cst [1] : vector<8x32xf32> to vector<8xf32>
    %28 = vector.shape_cast %27 : vector<8xf32> to vector<8x1xf32>
    %cst_8 = arith.constant 3.200000e+01 : f32
    %29 = vector.broadcast %cst_8 : f32 to vector<8x1xf32>
    %30 = arith.divf %28, %29 : vector<8x1xf32>
    %31 = vector.broadcast %30 : vector<8x1xf32> to vector<8x32xf32>
    %32 = arith.subf %26, %31 : vector<8x32xf32>
    %33 = arith.mulf %32, %32 : vector<8x32xf32>
    %cst_9 = arith.constant dense<0.000000e+00> : vector<8xf32>
    %34 = vector.multi_reduction <add>, %33, %cst_9 [1] : vector<8x32xf32> to vector<8xf32>
    %35 = vector.shape_cast %34 : vector<8xf32> to vector<8x1xf32>
    %cst_10 = arith.constant 3.200000e+01 : f32
    %36 = vector.broadcast %cst_10 : f32 to vector<8x1xf32>
    %37 = arith.divf %35, %36 : vector<8x1xf32>
    %38 = vector.broadcast %30 : vector<8x1xf32> to vector<8x32xf32>
    %39 = arith.subf %26, %38 : vector<8x32xf32>
    %cst_11 = arith.constant 9.99999974E-6 : f32
    %40 = vector.broadcast %cst_11 : f32 to vector<8x1xf32>
    %41 = arith.addf %37, %40 : vector<8x1xf32>
    %42 = math.rsqrt %41 : vector<8x1xf32>
    %43 = vector.broadcast %42 : vector<8x1xf32> to vector<8x32xf32>
    %44 = arith.mulf %39, %43 : vector<8x32xf32>
    %c0_12 = arith.constant 0 : index
    %c0_13 = arith.constant 0 : index
    %45 = vector.load %arg4[%c0_12, %c0_13] : memref<1x32xf32, #tpu.memory_space<vmem>>, vector<1x32xf32>
    %46 = vector.broadcast %45 : vector<1x32xf32> to vector<8x32xf32>
    %47 = arith.mulf %44, %46 : vector<8x32xf32>
    %c0_14 = arith.constant 0 : index
    %c0_15 = arith.constant 0 : index
    %48 = vector.load %arg5[%c0_14, %c0_15] : memref<1x32xf32, #tpu.memory_space<vmem>>, vector<1x32xf32>
    %49 = vector.broadcast %48 : vector<1x32xf32> to vector<8x32xf32>
    %50 = arith.addf %47, %49 : vector<8x32xf32>
    %cst_16 = arith.constant 0.000000e+00 : f32
    %51 = vector.broadcast %cst_16 : f32 to vector<8x32xf32>
    %52 = arith.maximumf %50, %51 : vector<8x32xf32>
    %c0_17 = arith.constant 0 : index
    %c0_18 = arith.constant 0 : index
    %53 = vector.load %arg6[%c0_17, %c0_18] : memref<32x32xf32, #tpu.memory_space<vmem>>, vector<32x32xf32>
    %cst_19 = arith.constant dense<0.000000e+00> : vector<8x32xf32>
    %54 = tpu.matmul %52, %53, %cst_19 {dimension_numbers = #tpu.dot_dimension_numbers<[1], [0], [0], [1], [0, 0, 1, 1], [], []>} : vector<8x32xf32>, vector<32x32xf32>, vector<8x32xf32> -> vector<8x32xf32>
    %c0_20 = arith.constant 0 : index
    %c0_21 = arith.constant 0 : index
    %55 = vector.load %arg7[%c0_20, %c0_21] : memref<1x32xf32, #tpu.memory_space<vmem>>, vector<1x32xf32>
    %56 = vector.broadcast %55 : vector<1x32xf32> to vector<8x32xf32>
    %57 = arith.addf %54, %56 : vector<8x32xf32>
    %c0_22 = arith.constant 0 : index
    %c0_23 = arith.constant 0 : index
    %58 = vector.load %arg8[%c0_22, %c0_23] : memref<32x128xf32, #tpu.memory_space<vmem>>, vector<32x128xf32>
    %cst_24 = arith.constant dense<0.000000e+00> : vector<8x128xf32>
    %59 = tpu.matmul %57, %58, %cst_24 {dimension_numbers = #tpu.dot_dimension_numbers<[1], [0], [0], [1], [0, 0, 1, 1], [], []>} : vector<8x32xf32>, vector<32x128xf32>, vector<8x128xf32> -> vector<8x128xf32>
    %c0_25 = arith.constant 0 : index
    %c0_26 = arith.constant 0 : index
    %60 = vector.load %arg9[%c0_25, %c0_26] : memref<1x128xf32, #tpu.memory_space<vmem>>, vector<1x128xf32>
    %61 = vector.broadcast %60 : vector<1x128xf32> to vector<8x128xf32>
    %62 = arith.addf %59, %61 : vector<8x128xf32>
    %63 = arith.mulf %62, %62 : vector<8x128xf32>
    %c124_i32 = arith.constant 124 : i32
    %64 = tpu.dynamic_rotate %62 by %c124_i32 dim 1 : vector<8x128xf32>, i32 -> vector<8x128xf32>
    %65 = arith.mulf %62, %64 : vector<8x128xf32>
    %c120_i32 = arith.constant 120 : i32
    %66 = tpu.dynamic_rotate %62 by %c120_i32 dim 1 : vector<8x128xf32>, i32 -> vector<8x128xf32>
    %67 = arith.mulf %62, %66 : vector<8x128xf32>
    %c116_i32 = arith.constant 116 : i32
    %68 = tpu.dynamic_rotate %62 by %c116_i32 dim 1 : vector<8x128xf32>, i32 -> vector<8x128xf32>
    %69 = arith.mulf %62, %68 : vector<8x128xf32>
    %70 = tpu.concatenate %63, %65, %67, %69 in 1 : vector<8x128xf32>, vector<8x128xf32>, vector<8x128xf32>, vector<8x128xf32> -> vector<8x512xf32>
    %c0_27 = arith.constant 0 : index
    %c0_28 = arith.constant 0 : index
    %71 = vector.load %arg10[%c0_27, %c0_28] : memref<512x128xf32, #tpu.memory_space<vmem>>, vector<512x128xf32>
    %cst_29 = arith.constant dense<0.000000e+00> : vector<8x128xf32>
    %72 = tpu.matmul %70, %71, %cst_29 {dimension_numbers = #tpu.dot_dimension_numbers<[1], [0], [0], [1], [0, 0, 1, 1], [], []>} : vector<8x512xf32>, vector<512x128xf32>, vector<8x128xf32> -> vector<8x128xf32>
    %c0_30 = arith.constant 0 : index
    %c0_31 = arith.constant 0 : index
    %73 = vector.load %arg11[%c0_30, %c0_31] : memref<8x128xf32, #tpu.memory_space<vmem>>, vector<8x128xf32>
    tpu.vector_store %arg11[%c0_30, %c0_31], %72 {strides = array<i32>} : memref<8x128xf32, #tpu.memory_space<vmem>>, vector<8x128xf32>,
    return
  }
  func.func @transform_0(%arg0: i32) -> (i32, i32) {
    %c0_i32 = arith.constant 0 : i32
    %c0_i32_0 = arith.constant 0 : i32
    return %arg0, %c0_i32 : i32, i32
  }
  func.func @transform_1(%arg0: i32) -> (i32, i32) {
    %c0_i32 = arith.constant 0 : i32
    %c0_i32_0 = arith.constant 0 : i32
    %c0_i32_1 = arith.constant 0 : i32
    return %c0_i32, %c0_i32_0 : i32, i32
  }
  func.func @transform_2(%arg0: i32) -> (i32, i32) {
    %c0_i32 = arith.constant 0 : i32
    %c0_i32_0 = arith.constant 0 : i32
    %c0_i32_1 = arith.constant 0 : i32
    return %c0_i32, %c0_i32_0 : i32, i32
  }
  func.func @transform_3(%arg0: i32) -> (i32, i32) {
    %c0_i32 = arith.constant 0 : i32
    %c0_i32_0 = arith.constant 0 : i32
    %c0_i32_1 = arith.constant 0 : i32
    return %c0_i32, %c0_i32_0 : i32, i32
  }
  func.func @transform_4(%arg0: i32) -> (i32, i32) {
    %c0_i32 = arith.constant 0 : i32
    %c0_i32_0 = arith.constant 0 : i32
    %c0_i32_1 = arith.constant 0 : i32
    return %c0_i32, %c0_i32_0 : i32, i32
  }
  func.func @transform_5(%arg0: i32) -> (i32, i32) {
    %c0_i32 = arith.constant 0 : i32
    %c0_i32_0 = arith.constant 0 : i32
    %c0_i32_1 = arith.constant 0 : i32
    return %c0_i32, %c0_i32_0 : i32, i32
  }
  func.func @transform_6(%arg0: i32) -> (i32, i32) {
    %c0_i32 = arith.constant 0 : i32
    %c0_i32_0 = arith.constant 0 : i32
    %c0_i32_1 = arith.constant 0 : i32
    return %c0_i32, %c0_i32_0 : i32, i32
  }
  func.func @transform_7(%arg0: i32) -> (i32, i32) {
    %c0_i32 = arith.constant 0 : i32
    %c0_i32_0 = arith.constant 0 : i32
    %c0_i32_1 = arith.constant 0 : i32
    return %c0_i32, %c0_i32_0 : i32, i32
  }
  func.func @transform_8(%arg0: i32) -> (i32, i32) {
    %c0_i32 = arith.constant 0 : i32
    %c0_i32_0 = arith.constant 0 : i32
    %c0_i32_1 = arith.constant 0 : i32
    return %c0_i32, %c0_i32_0 : i32, i32
  }
  func.func @transform_9(%arg0: i32) -> (i32, i32) {
    %c0_i32 = arith.constant 0 : i32
    %c0_i32_0 = arith.constant 0 : i32
    %c0_i32_1 = arith.constant 0 : i32
    return %c0_i32, %c0_i32_0 : i32, i32
  }
  func.func @transform_10(%arg0: i32) -> (i32, i32) {
    %c0_i32 = arith.constant 0 : i32
    %c0_i32_0 = arith.constant 0 : i32
    return %arg0, %c0_i32 : i32, i32
  }
}

</mosaic_0001>

<llo_original>
// kernel: tpu_custom_call.1
$region0: #{tpu_custom_call.1}
  #allocation0 [shape = 'u32[]', space=smem, size = 0x4, offset = 0x4, fixed_abs, tag = 'smem constant byte address 0x4 - core index']
  #allocation1 [shape = 'u32[144,128]{1,0:T(1,128)}', space=vmem, size = 0x12000, scoped, tag = 'internal scratch']
  %s0 = inlined_call_operand.vmem [shape: f32[8,4], index: 0, kind: input, shape index: {}]
  %s1 = inlined_call_operand.vmem [shape: f32[4,32], index: 1, kind: input, shape index: {}]
  %s2 = inlined_call_operand.vmem [shape: f32[1,32], index: 2, kind: input, shape index: {}]
  %s3 = inlined_call_operand.vmem [shape: f32[1,32], index: 3, kind: input, shape index: {}]
  %s4 = inlined_call_operand.hbm [shape: f32[1,32], index: 4, kind: input, shape index: {}]
  %s5 = inlined_call_operand.hbm [shape: f32[32,32], index: 5, kind: input, shape index: {}]
  %s6 = inlined_call_operand.hbm [shape: f32[1,32], index: 6, kind: input, shape index: {}]
  %s7 = inlined_call_operand.vmem [shape: f32[32,128], index: 7, kind: input, shape index: {}]
  %s8 = inlined_call_operand.vmem [shape: f32[1,128], index: 8, kind: input, shape index: {}]
  %s9 = inlined_call_operand.hbm [shape: f32[512,128], index: 9, kind: input, shape index: {}]
  %s10 = inlined_call_operand.hbm [shape: f32[8,128], index: 10, kind: output, shape index: {}]
  %s11 = sld [smem:[#allocation0]]
  $region66: #{tpu_custom_call.1} parent=0
    _
  %s13 = ssub.s32 1, %s11
  %s14 = scalar_select 0, %s13, %s11
  $region1: #{tpu_custom_call.1} parent=0
    #allocation2 [shape = 'u8[512]{0}', space=vmem, size = 0x400, scoped, tag = 'input window, operand 4, single buffered']
    #allocation3 [shape = 's32[1]{0}', space=sflag, size = 0x4, scoped, tag = 'scoped memory for tpu_custom_call.1']
    #allocation4 [shape = 's32[1]{0}', space=sflag, size = 0x4, scoped, tag = 'scoped memory for tpu_custom_call.1']
    #allocation5 [shape = 'u8[16384]{0}', space=vmem, size = 0x4000, scoped, tag = 'input window, operand 5, single buffered']
    #allocation6 [shape = 's32[1]{0}', space=sflag, size = 0x4, scoped, tag = 'scoped memory for tpu_custom_call.1']
    #allocation7 [shape = 'u8[512]{0}', space=vmem, size = 0x400, scoped, tag = 'input window, operand 6, single buffered']
    #allocation8 [shape = 'u8[262144]{0}', space=vmem, size = 0x40000, scoped, tag = 'input window, operand 9, single buffered']
    #allocation9 [shape = 's32[1]{0}', space=sflag, size = 0x4, scoped, tag = 'scoped memory for tpu_custom_call.1']
    #allocation10 [shape = 'u8[4096]{0}', space=vmem, size = 0x1000, scoped, tag = 'output window, operand 0, single buffered']
    %15 = vsyncpa [#allocation3], 0
    %16 = vsyncpa [#allocation6], 0
    %17 = vsyncpa [#allocation9], 0
    %18 = vsyncpa [#allocation4], 0
    // Predicated region
    $region2: #{tpu_custom_call.1} parent=1 // pred_check
      _
    $region3: #{tpu_custom_call.1} parent=1 // pred_check_branch
      %20 = sbr.rel (0) target = $region5
    $region4: #{tpu_custom_call.1} parent=1 // pred_region
      _
    $region5: #{tpu_custom_call.1} parent=1 // pred_fallthru
      _
    // Predicated region
    $region6: #{tpu_custom_call.1} parent=1 // pred_check
      _
    $region7: #{tpu_custom_call.1} parent=1 // pred_check_branch
      %22 = sbr.rel (0) target = $region9
    $region8: #{tpu_custom_call.1} parent=1 // pred_region
      _
    $region9: #{tpu_custom_call.1} parent=1 // pred_fallthru
      _
    // Predicated region
    $region10: #{tpu_custom_call.1} parent=1 // pred_check
      _
    $region11: #{tpu_custom_call.1} parent=1 // pred_check_branch
      %24 = sbr.rel (0) target = $region13
    $region12: #{tpu_custom_call.1} parent=1 // pred_region
      _
    $region13: #{tpu_custom_call.1} parent=1 // pred_fallthru
      _
    // Predicated region
    $region14: #{tpu_custom_call.1} parent=1 // pred_check
      _
    $region15: #{tpu_custom_call.1} parent=1 // pred_check_branch
      %26 = sbr.rel (0) target = $region17
    $region16: #{tpu_custom_call.1} parent=1 // pred_region
      _
    $region17: #{tpu_custom_call.1} parent=1 // pred_fallthru
      _
    // Predicated region
    $region18: #{tpu_custom_call.1} parent=1 // pred_check
      _
    $region19: #{tpu_custom_call.1} parent=1 // pred_check_branch
      %28 = sbr.rel (0) target = $region21
    $region20: #{tpu_custom_call.1} parent=1 // pred_region
      %s30 = ssub.s32 16, 16
      %31 = vsyncadd [#allocation3], %s30
      %s33 = sshll.u32 [#allocation2], 4
      %s34 = int_to_ptr.vmem [resolvable:$true] %s33
      %36 = dma.hbm_to_vmem [thread:$0]  %s4, 16, %s34, [#allocation3]
    $region21: #{tpu_custom_call.1} parent=1 // pred_fallthru
      _
    // Predicated region
    $region22: #{tpu_custom_call.1} parent=1 // pred_check
      _
    $region23: #{tpu_custom_call.1} parent=1 // pred_check_branch
      %38 = sbr.rel (0) target = $region25
    $region24: #{tpu_custom_call.1} parent=1 // pred_region
      %s40 = ssub.s32 512, 512
      %41 = vsyncadd [#allocation6], %s40
      %s42 = sshll.u32 [#allocation5], 4
      %s43 = int_to_ptr.vmem [resolvable:$true] %s42
      %48 = dma.hbm_to_vmem [thread:$0]  %s5, 512, %s43, [#allocation6], 128, 128, 8
    $region25: #{tpu_custom_call.1} parent=1 // pred_fallthru
      _
    // Predicated region
    $region26: #{tpu_custom_call.1} parent=1 // pred_check
      _
    $region27: #{tpu_custom_call.1} parent=1 // pred_check_branch
      %50 = sbr.rel (0) target = $region29
    $region28: #{tpu_custom_call.1} parent=1 // pred_region
      %s52 = ssub.s32 16, 16
      %53 = vsyncadd [#allocation6], %s52
      %s55 = sshll.u32 [#allocation7], 4
      %s56 = int_to_ptr.vmem [resolvable:$true] %s55
      %58 = dma.hbm_to_vmem [thread:$0]  %s6, 16, %s56, [#allocation6]
    $region29: #{tpu_custom_call.1} parent=1 // pred_fallthru
      _
    // Predicated region
    $region30: #{tpu_custom_call.1} parent=1 // pred_check
      _
    $region31: #{tpu_custom_call.1} parent=1 // pred_check_branch
      %60 = sbr.rel (0) target = $region33
    $region32: #{tpu_custom_call.1} parent=1 // pred_region
      _
    $region33: #{tpu_custom_call.1} parent=1 // pred_fallthru
      _
    // Predicated region
    $region34: #{tpu_custom_call.1} parent=1 // pred_check
      _
    $region35: #{tpu_custom_call.1} parent=1 // pred_check_branch
      %62 = sbr.rel (0) target = $region37
    $region36: #{tpu_custom_call.1} parent=1 // pred_region
      _
    $region37: #{tpu_custom_call.1} parent=1 // pred_fallthru
      _
    // Predicated region
    $region38: #{tpu_custom_call.1} parent=1 // pred_check
      _
    $region39: #{tpu_custom_call.1} parent=1 // pred_check_branch
      %64 = sbr.rel (0) target = $region41
    $region40: #{tpu_custom_call.1} parent=1 // pred_region
      %s66 = ssub.s32 8192, 8192
      %67 = vsyncadd [#allocation9], %s66
      %s68 = sshll.u32 [#allocation8], 4
      %s69 = int_to_ptr.vmem [resolvable:$true] %s68
      %74 = dma.hbm_to_vmem [thread:$0]  %s9, 8192, %s69, [#allocation9], 128, 128, 8
    $region41: #{tpu_custom_call.1} parent=1 // pred_fallthru
      _
    // Predicated region
    $region42: #{tpu_custom_call.1} parent=1 // pred_check
      _
    $region43: #{tpu_custom_call.1} parent=1 // pred_check_branch
      %76 = sbr.rel (0) target = $region45
    $region44: #{tpu_custom_call.1} parent=1 // pred_region
      %77 = dma.done [#allocation3], 16
    $region45: #{tpu_custom_call.1} parent=1 // pred_fallthru
      _
    // Predicated region
    $region46: #{tpu_custom_call.1} parent=1 // pred_check
      _
    $region47: #{tpu_custom_call.1} parent=1 // pred_check_branch
      %79 = sbr.rel (0) target = $region49
    $region48: #{tpu_custom_call.1} parent=1 // pred_region
      %80 = dma.done [#allocation6], 512
    $region49: #{tpu_custom_call.1} parent=1 // pred_fallthru
      _
    // Predicated region
    $region50: #{tpu_custom_call.1} parent=1 // pred_check
      _
    $region51: #{tpu_custom_call.1} parent=1 // pred_check_branch
      %82 = sbr.rel (0) target = $region53
    $region52: #{tpu_custom_call.1} parent=1 // pred_region
      %83 = dma.done [#allocation6], 16
    $region53: #{tpu_custom_call.1} parent=1 // pred_fallthru
      _
    // Predicated region
    $region54: #{tpu_custom_call.1} parent=1 // pred_check
      _
    $region55: #{tpu_custom_call.1} parent=1 // pred_check_branch
      %85 = sbr.rel (0) target = $region57
    $region56: #{tpu_custom_call.1} parent=1 // pred_region
      %86 = dma.done [#allocation9], 8192
    $region57: #{tpu_custom_call.1} parent=1 // pred_fallthru
      _
    %v87 = vld [vmem:[%s0] sm:$0xff]
    %v88 = vld [vmem:[%s2] sm:$0x1]
    %v89 = vld [vmem:[%s1] sm:$0x1]
    %91 = vset.pattern.permute.xlu0 0
    %92 = vperm.xlu0 %91, %v87
    %v93 = vpop.permute.xlu0 %92
    %v95 = vlaneseq
    %v96 = vshrl.u32 %v95, 7
    %v97 = vsub.s32 0, %v96
    %v98 = vrot.slane %v89, %v97
    %v99 = vmul.f32 %v93, %v98
    %v101 = vlaneseq
    %v102 = vshrl.u32 %v101, 7
    %v103 = vsub.s32 0, %v102
    %v104 = vrot.slane %v88, %v103
    %v106 = vadd.f32 %v104, %v99
    %v107 = vld [vmem:[%s1 + $0x1] sm:$0x1]
    %108 = vset.pattern.permute.xlu0 1
    %109 = vperm.xlu0 %108, %v87
    %v110 = vpop.permute.xlu0 %109
    %v112 = vlaneseq
    %v113 = vshrl.u32 %v112, 7
    %v114 = vsub.s32 0, %v113
    %v115 = vrot.slane %v107, %v114
    %v116 = vmul.f32 %v110, %v115
    %v117 = vadd.f32 %v106, %v116
    %v118 = vld [vmem:[%s1 + $0x2] sm:$0x1]
    %119 = vset.pattern.permute.xlu0 2
    %120 = vperm.xlu0 %119, %v87
    %v121 = vpop.permute.xlu0 %120
    %v123 = vlaneseq
    %v124 = vshrl.u32 %v123, 7
    %v125 = vsub.s32 0, %v124
    %v126 = vrot.slane %v118, %v125
    %v127 = vmul.f32 %v121, %v126
    %v128 = vadd.f32 %v117, %v127
    %v129 = vld [vmem:[%s1 + $0x3] sm:$0x1]
    %130 = vset.pattern.permute.xlu0 3
    %131 = vperm.xlu0 %130, %v87
    %v132 = vpop.permute.xlu0 %131
    %v134 = vlaneseq
    %v135 = vshrl.u32 %v134, 7
    %v136 = vsub.s32 0, %v135
    %v137 = vrot.slane %v129, %v136
    %v138 = vmul.f32 %v132, %v137
    %v139 = vadd.f32 %v128, %v138
    %vm140 = vcmask 261120
    %v141 = vsel %vm140, %v139, 0.0
    %142 = vadd.xlane.f32.xlu0 %v141
    %v143 = vpop.xlane.xlu0 %142
    %v144 = vrcp.pop 32.0
    %v145 = vmul.f32 %v143, %v144
    %v146 = vsub.f32 %v139, %v145
    %v147 = vmul.f32 %v146, %v146
    %v148 = vsel %vm140, %v147, 0.0
    %149 = vadd.xlane.f32.xlu0 %v148
    %v150 = vpop.xlane.xlu0 %149
    %v151 = vmul.f32 %v150, %v144
    %v152 = vadd.f32 %v151, 1e-05
    %v153 = vrsqrt.pop %v152
    %v154 = vmul.f32 %v146, %v153
    %v155 = vld [vmem:[%s3] sm:$0x1]
    %v157 = vlaneseq
    %v158 = vshrl.u32 %v157, 7
    %v159 = vsub.s32 0, %v158
    %v160 = vrot.slane %v155, %v159
    %v162 = vmul.f32 %v154, %v160
    %v163 = vld [vmem:[#allocation2] sm:$0x1]
    %v165 = vlaneseq
    %v166 = vshrl.u32 %v165, 7
    %v167 = vsub.s32 0, %v166
    %v168 = vrot.slane %v163, %v167
    %v170 = vadd.f32 %v162, %v168
    %v171 = vmax.f32 %v170, 0.0
    %v172 = vld [vmem:[#allocation5] sm:$0xff]
    %v173 = vld [vmem:[#allocation5 + $0x8] sm:$0xff]
    %v174 = vld [vmem:[#allocation5 + $0x10] sm:$0xff]
    %v175 = vld [vmem:[#allocation5 + $0x18] sm:$0xff]
    %v176 = vld [vmem:[#allocation7] sm:$0x1]
    %v178 = vlaneseq
    %v179 = vshrl.u32 %v178, 7
    %v180 = vsub.s32 0, %v179
    %v181 = vrot.slane %v176, %v180
    %v184 = vsel %vm140, %v171, 0
    %186 = vmatprep.subr.mxu0 0.0
    %187 = vmatpush1.msra.mxu0 %v172
    %188 = vmatprep.subr.mxu0 0.0
    %189 = vmatpush1.msra.mxu0 %v173
    %190 = vmatprep.subr.mxu0 0.0
    %191 = vmatpush1.msra.mxu0 %v174
    %192 = vmatprep.subr.mxu0 0.0
    %193 = vmatpush1.msra.mxu0 %v175
    %194 = vmatprep.subr.mxu0 0.0
    %195 = vmatpush1.msra.mxu0 0.0
    %196 = vmatprep.subr.mxu0 0.0
    %197 = vmatpush1.msra.mxu0 0.0
    %198 = vmatprep.subr.mxu0 0.0
    %199 = vmatpush1.msra.mxu0 0.0
    %200 = vmatprep.subr.mxu0 0.0
    %201 = vmatpush1.msra.mxu0 0.0
    %202 = vmatprep.subr.mxu0 0.0
    %203 = vmatpush1.msra.mxu0 0.0
    %204 = vmatprep.subr.mxu0 0.0
    %205 = vmatpush1.msra.mxu0 0.0
    %206 = vmatprep.subr.mxu0 0.0
    %207 = vmatpush1.msra.mxu0 0.0
    %208 = vmatprep.subr.mxu0 0.0
    %209 = vmatpush1.msra.mxu0 0.0
    %210 = vmatprep.subr.mxu0 0.0
    %211 = vmatpush1.msra.mxu0 0.0
    %212 = vmatprep.subr.mxu0 0.0
    %213 = vmatpush1.msra.mxu0 0.0
    %214 = vmatprep.subr.mxu0 0.0
    %215 = vmatpush1.msra.mxu0 0.0
    %216 = vmatprep.subr.mxu0 0.0
    %217 = vmatpush1.msra.mxu0 0.0
    %218 = vmatprep.subr.mxu0 0.0
    %219 = vmatpush1.msra.mxu0 0.0
    %220 = vmatprep.subr.mxu0 0.0
    %221 = vmatpush1.msra.mxu0 0.0
    %222 = vmatprep.subr.mxu0 0.0
    %223 = vmatpush1.msra.mxu0 0.0
    %224 = vmatprep.subr.mxu0 0.0
    %225 = vmatpush1.msra.mxu0 0.0
    %226 = vmatprep.subr.mxu0 0.0
    %227 = vmatpush1.msra.mxu0 0.0
    %228 = vmatprep.subr.mxu0 0.0
    %229 = vmatpush1.msra.mxu0 0.0
    %230 = vmatprep.subr.mxu0 0.0
    %231 = vmatpush1.msra.mxu0 0.0
    %232 = vmatprep.subr.mxu0 0.0
    %233 = vmatpush1.msra.mxu0 0.0
    %234 = vmatprep.subr.mxu0 0.0
    %235 = vmatpush1.msra.mxu0 0.0
    %236 = vmatprep.subr.mxu0 0.0
    %237 = vmatpush1.msra.mxu0 0.0
    %238 = vmatprep.subr.mxu0 0.0
    %239 = vmatpush1.msra.mxu0 0.0
    %240 = vmatprep.subr.mxu0 0.0
    %241 = vmatpush1.msra.mxu0 0.0
    %242 = vmatprep.subr.mxu0 0.0
    %243 = vmatpush1.msra.mxu0 0.0
    %244 = vmatprep.subr.mxu0 0.0
    %245 = vmatpush1.msra.mxu0 0.0
    %246 = vmatprep.subr.mxu0 0.0
    %247 = vmatpush1.msra.mxu0 0.0
    %248 = vmatprep.subr.mxu0 0.0
    %249 = vmatpush1.msra.mxu0 0.0
    %250 = vmatprep.mubr.f32.mxu0 0.0
    %251 = vmatmul.mubr.f32.gmra.mrb[0].mxu0 %v184
    %v252 = vpop.f32.mrb[0].mxu0
    %v253 = vadd.f32 %v181, %v252
    %v254 = vpop.f32.mrb[0].mxu0
    %255 = vdwg.mxu0
    %v256 = vld [vmem:[%s7] sm:$0xff]
    %v257 = vld [vmem:[%s7 + $0x8] sm:$0xff]
    %v258 = vld [vmem:[%s7 + $0x10] sm:$0xff]
    %v259 = vld [vmem:[%s7 + $0x18] sm:$0xff]
    %v260 = vld [vmem:[%s8] sm:$0x1]
    %v262 = vlaneseq
    %v263 = vshrl.u32 %v262, 7
    %v264 = vsub.s32 0, %v263
    %v265 = vrot.slane %v260, %v264
    %v268 = vsel %vm140, %v253, 0
    %270 = vmatprep.subr.mxu0 0.0
    %271 = vmatpush1.msra.mxu0 %v256
    %272 = vmatprep.subr.mxu0 0.0
    %273 = vmatpush1.msra.mxu0 %v257
    %274 = vmatprep.subr.mxu0 0.0
    %275 = vmatpush1.msra.mxu0 %v258
    %276 = vmatprep.subr.mxu0 0.0
    %277 = vmatpush1.msra.mxu0 %v259
    %278 = vmatprep.subr.mxu0 0.0
    %279 = vmatpush1.msra.mxu0 0.0
    %280 = vmatprep.subr.mxu0 0.0
    %281 = vmatpush1.msra.mxu0 0.0
    %282 = vmatprep.subr.mxu0 0.0
    %283 = vmatpush1.msra.mxu0 0.0
    %284 = vmatprep.subr.mxu0 0.0
    %285 = vmatpush1.msra.mxu0 0.0
    %286 = vmatprep.subr.mxu0 0.0
    %287 = vmatpush1.msra.mxu0 0.0
    %288 = vmatprep.subr.mxu0 0.0
    %289 = vmatpush1.msra.mxu0 0.0
    %290 = vmatprep.subr.mxu0 0.0
    %291 = vmatpush1.msra.mxu0 0.0
    %292 = vmatprep.subr.mxu0 0.0
    %293 = vmatpush1.msra.mxu0 0.0
    %294 = vmatprep.subr.mxu0 0.0
    %295 = vmatpush1.msra.mxu0 0.0
    %296 = vmatprep.subr.mxu0 0.0
    %297 = vmatpush1.msra.mxu0 0.0
    %298 = vmatprep.subr.mxu0 0.0
    %299 = vmatpush1.msra.mxu0 0.0
    %300 = vmatprep.subr.mxu0 0.0
    %301 = vmatpush1.msra.mxu0 0.0
    %302 = vmatprep.subr.mxu0 0.0
    %303 = vmatpush1.msra.mxu0 0.0
    %304 = vmatprep.subr.mxu0 0.0
    %305 = vmatpush1.msra.mxu0 0.0
    %306 = vmatprep.subr.mxu0 0.0
    %307 = vmatpush1.msra.mxu0 0.0
    %308 = vmatprep.subr.mxu0 0.0
    %309 = vmatpush1.msra.mxu0 0.0
    %310 = vmatprep.subr.mxu0 0.0
    %311 = vmatpush1.msra.mxu0 0.0
    %312 = vmatprep.subr.mxu0 0.0
    %313 = vmatpush1.msra.mxu0 0.0
    %314 = vmatprep.subr.mxu0 0.0
    %315 = vmatpush1.msra.mxu0 0.0
    %316 = vmatprep.subr.mxu0 0.0
    %317 = vmatpush1.msra.mxu0 0.0
    %318 = vmatprep.subr.mxu0 0.0
    %319 = vmatpush1.msra.mxu0 0.0
    %320 = vmatprep.subr.mxu0 0.0
    %321 = vmatpush1.msra.mxu0 0.0
    %322 = vmatprep.subr.mxu0 0.0
    %323 = vmatpush1.msra.mxu0 0.0
    %324 = vmatprep.subr.mxu0 0.0
    %325 = vmatpush1.msra.mxu0 0.0
    %326 = vmatprep.subr.mxu0 0.0
    %327 = vmatpush1.msra.mxu0 0.0
    %328 = vmatprep.subr.mxu0 0.0
    %329 = vmatpush1.msra.mxu0 0.0
    %330 = vmatprep.subr.mxu0 0.0
    %331 = vmatpush1.msra.mxu0 0.0
    %332 = vmatprep.subr.mxu0 0.0
    %333 = vmatpush1.msra.mxu0 0.0
    %334 = vmatprep.mubr.f32.mxu0 0.0
    %335 = vmatmul.mubr.f32.gmra.mrb[0].mxu0 %v268
    %v336 = vpop.f32.mrb[0].mxu0
    %v337 = vadd.f32 %v265, %v336
    %v338 = vpop.f32.mrb[0].mxu0
    %339 = vdwg.mxu0
    %v340 = vmul.f32 %v337, %v337
    %341 = vrot.lane.b32.xlu0 %v337, 124
    %v342 = vpop.permute.xlu0 %341
    %v343 = vmul.f32 %v337, %v342
    %344 = vrot.lane.b32.xlu0 %v337, 120
    %v345 = vpop.permute.xlu0 %344
    %v346 = vmul.f32 %v337, %v345
    %347 = vrot.lane.b32.xlu0 %v337, 116
    %v348 = vpop.permute.xlu0 %347
    %v349 = vmul.f32 %v337, %v348
    %v350 = vld [vmem:[#allocation8] sm:$0xff]
    %v351 = vld [vmem:[#allocation8 + $0x8] sm:$0xff]
    %v352 = vld [vmem:[#allocation8 + $0x10] sm:$0xff]
    %v353 = vld [vmem:[#allocation8 + $0x18] sm:$0xff]
    %v354 = vld [vmem:[#allocation8 + $0x20] sm:$0xff]
    %v355 = vld [vmem:[#allocation8 + $0x28] sm:$0xff]
    %v356 = vld [vmem:[#allocation8 + $0x30] sm:$0xff]
    %v357 = vld [vmem:[#allocation8 + $0x38] sm:$0xff]
    %v358 = vld [vmem:[#allocation8 + $0x40] sm:$0xff]
    %v359 = vld [vmem:[#allocation8 + $0x48] sm:$0xff]
    %v360 = vld [vmem:[#allocation8 + $0x50] sm:$0xff]
    %v361 = vld [vmem:[#allocation8 + $0x58] sm:$0xff]
    %v362 = vld [vmem:[#allocation8 + $0x60] sm:$0xff]
    %v363 = vld [vmem:[#allocation8 + $0x68] sm:$0xff]
    %v364 = vld [vmem:[#allocation8 + $0x70] sm:$0xff]
    %v365 = vld [vmem:[#allocation8 + $0x78] sm:$0xff]
    %v366 = vld [vmem:[#allocation8 + $0x80] sm:$0xff]
    %v367 = vld [vmem:[#allocation8 + $0x88] sm:$0xff]
    %v368 = vld [vmem:[#allocation8 + $0x90] sm:$0xff]
    %v369 = vld [vmem:[#allocation8 + $0x98] sm:$0xff]
    %v370 = vld [vmem:[#allocation8 + $0xa0] sm:$0xff]
    %v371 = vld [vmem:[#allocation8 + $0xa8] sm:$0xff]
    %v372 = vld [vmem:[#allocation8 + $0xb0] sm:$0xff]
    %v373 = vld [vmem:[#allocation8 + $0xb8] sm:$0xff]
    %v374 = vld [vmem:[#allocation8 + $0xc0] sm:$0xff]
    %v375 = vld [vmem:[#allocation8 + $0xc8] sm:$0xff]
    %v376 = vld [vmem:[#allocation8 + $0xd0] sm:$0xff]
    %v377 = vld [vmem:[#allocation8 + $0xd8] sm:$0xff]
    %v378 = vld [vmem:[#allocation8 + $0xe0] sm:$0xff]
    %v379 = vld [vmem:[#allocation8 + $0xe8] sm:$0xff]
    %v380 = vld [vmem:[#allocation8 + $0xf0] sm:$0xff]
    %v381 = vld [vmem:[#allocation8 + $0xf8] sm:$0xff]
    %v382 = vld [vmem:[#allocation8 + $0x100] sm:$0xff]
    %v383 = vld [vmem:[#allocation8 + $0x108] sm:$0xff]
    %v384 = vld [vmem:[#allocation8 + $0x110] sm:$0xff]
    %v385 = vld [vmem:[#allocation8 + $0x118] sm:$0xff]
    %v386 = vld [vmem:[#allocation8 + $0x120] sm:$0xff]
    %v387 = vld [vmem:[#allocation8 + $0x128] sm:$0xff]
    %v388 = vld [vmem:[#allocation8 + $0x130] sm:$0xff]
    %v389 = vld [vmem:[#allocation8 + $0x138] sm:$0xff]
    %v390 = vld [vmem:[#allocation8 + $0x140] sm:$0xff]
    %v391 = vld [vmem:[#allocation8 + $0x148] sm:$0xff]
    %v392 = vld [vmem:[#allocation8 + $0x150] sm:$0xff]
    %v393 = vld [vmem:[#allocation8 + $0x158] sm:$0xff]
    %v394 = vld [vmem:[#allocation8 + $0x160] sm:$0xff]
    %v395 = vld [vmem:[#allocation8 + $0x168] sm:$0xff]
    %v396 = vld [vmem:[#allocation8 + $0x170] sm:$0xff]
    %v397 = vld [vmem:[#allocation8 + $0x178] sm:$0xff]
    %v398 = vld [vmem:[#allocation8 + $0x180] sm:$0xff]
    %v399 = vld [vmem:[#allocation8 + $0x188] sm:$0xff]
    %v400 = vld [vmem:[#allocation8 + $0x190] sm:$0xff]
    %v401 = vld [vmem:[#allocation8 + $0x198] sm:$0xff]
    %v402 = vld [vmem:[#allocation8 + $0x1a0] sm:$0xff]
    %v403 = vld [vmem:[#allocation8 + $0x1a8] sm:$0xff]
    %v404 = vld [vmem:[#allocation8 + $0x1b0] sm:$0xff]
    %v405 = vld [vmem:[#allocation8 + $0x1b8] sm:$0xff]
    %v406 = vld [vmem:[#allocation8 + $0x1c0] sm:$0xff]
    %v407 = vld [vmem:[#allocation8 + $0x1c8] sm:$0xff]
    %v408 = vld [vmem:[#allocation8 + $0x1d0] sm:$0xff]
    %v409 = vld [vmem:[#allocation8 + $0x1d8] sm:$0xff]
    %v410 = vld [vmem:[#allocation8 + $0x1e0] sm:$0xff]
    %v411 = vld [vmem:[#allocation8 + $0x1e8] sm:$0xff]
    %v412 = vld [vmem:[#allocation8 + $0x1f0] sm:$0xff]
    %v413 = vld [vmem:[#allocation8 + $0x1f8] sm:$0xff]
    %414 = vmatprep.subr.mxu0 0.0
    %415 = vmatpush1.msra.mxu0 %v350
    %416 = vmatprep.subr.mxu0 0.0
    %417 = vmatpush1.msra.mxu0 %v351
    %418 = vmatprep.subr.mxu0 0.0
    %419 = vmatpush1.msra.mxu0 %v352
    %420 = vmatprep.subr.mxu0 0.0
    %421 = vmatpush1.msra.mxu0 %v353
    %422 = vmatprep.subr.mxu0 0.0
    %423 = vmatpush1.msra.mxu0 %v354
    %424 = vmatprep.subr.mxu0 0.0
    %425 = vmatpush1.msra.mxu0 %v355
    %426 = vmatprep.subr.mxu0 0.0
    %427 = vmatpush1.msra.mxu0 %v356
    %428 = vmatprep.subr.mxu0 0.0
    %429 = vmatpush1.msra.mxu0 %v357
    %430 = vmatprep.subr.mxu0 0.0
    %431 = vmatpush1.msra.mxu0 %v358
    %432 = vmatprep.subr.mxu0 0.0
    %433 = vmatpush1.msra.mxu0 %v359
    %434 = vmatprep.subr.mxu0 0.0
    %435 = vmatpush1.msra.mxu0 %v360
    %436 = vmatprep.subr.mxu0 0.0
    %437 = vmatpush1.msra.mxu0 %v361
    %438 = vmatprep.subr.mxu0 0.0
    %439 = vmatpush1.msra.mxu0 %v362
    %440 = vmatprep.subr.mxu0 0.0
    %441 = vmatpush1.msra.mxu0 %v363
    %442 = vmatprep.subr.mxu0 0.0
    %443 = vmatpush1.msra.mxu0 %v364
    %444 = vmatprep.subr.mxu0 0.0
    %445 = vmatpush1.msra.mxu0 %v365
    %446 = vmatprep.subr.mxu0 0.0
    %447 = vmatpush1.msra.mxu0 %v366
    %448 = vmatprep.subr.mxu0 0.0
    %449 = vmatpush1.msra.mxu0 %v367
    %450 = vmatprep.subr.mxu0 0.0
    %451 = vmatpush1.msra.mxu0 %v368
    %452 = vmatprep.subr.mxu0 0.0
    %453 = vmatpush1.msra.mxu0 %v369
    %454 = vmatprep.subr.mxu0 0.0
    %455 = vmatpush1.msra.mxu0 %v370
    %456 = vmatprep.subr.mxu0 0.0
    %457 = vmatpush1.msra.mxu0 %v371
    %458 = vmatprep.subr.mxu0 0.0
    %459 = vmatpush1.msra.mxu0 %v372
    %460 = vmatprep.subr.mxu0 0.0
    %461 = vmatpush1.msra.mxu0 %v373
    %462 = vmatprep.subr.mxu0 0.0
    %463 = vmatpush1.msra.mxu0 %v374
    %464 = vmatprep.subr.mxu0 0.0
    %465 = vmatpush1.msra.mxu0 %v375
    %466 = vmatprep.subr.mxu0 0.0
    %467 = vmatpush1.msra.mxu0 %v376
    %468 = vmatprep.subr.mxu0 0.0
    %469 = vmatpush1.msra.mxu0 %v377
    %470 = vmatprep.subr.mxu0 0.0
    %471 = vmatpush1.msra.mxu0 %v378
    %472 = vmatprep.subr.mxu0 0.0
    %473 = vmatpush1.msra.mxu0 %v379
    %474 = vmatprep.subr.mxu0 0.0
    %475 = vmatpush1.msra.mxu0 %v380
    %476 = vmatprep.subr.mxu0 0.0
    %477 = vmatpush1.msra.mxu0 %v381
    %478 = vmatprep.mubr.f32.mxu0 %v343
    %479 = vmatmul.mubr.f32.gmra.mrb[0].mxu0 %v340
    %v480 = vpop.f32.mrb[0].mxu0
    %v481 = vadd.f32 0.0, %v480
    %v482 = vpop.f32.mrb[0].mxu0
    %483 = vdwg.mxu0
    %484 = vmatprep.subr.mxu0 0.0
    %485 = vmatpush1.msra.mxu0 %v382
    %486 = vmatprep.subr.mxu0 0.0
    %487 = vmatpush1.msra.mxu0 %v383
    %488 = vmatprep.subr.mxu0 0.0
    %489 = vmatpush1.msra.mxu0 %v384
    %490 = vmatprep.subr.mxu0 0.0
    %491 = vmatpush1.msra.mxu0 %v385
    %492 = vmatprep.subr.mxu0 0.0
    %493 = vmatpush1.msra.mxu0 %v386
    %494 = vmatprep.subr.mxu0 0.0
    %495 = vmatpush1.msra.mxu0 %v387
    %496 = vmatprep.subr.mxu0 0.0
    %497 = vmatpush1.msra.mxu0 %v388
    %498 = vmatprep.subr.mxu0 0.0
    %499 = vmatpush1.msra.mxu0 %v389
    %500 = vmatprep.subr.mxu0 0.0
    %501 = vmatpush1.msra.mxu0 %v390
    %502 = vmatprep.subr.mxu0 0.0
    %503 = vmatpush1.msra.mxu0 %v391
    %504 = vmatprep.subr.mxu0 0.0
    %505 = vmatpush1.msra.mxu0 %v392
    %506 = vmatprep.subr.mxu0 0.0
    %507 = vmatpush1.msra.mxu0 %v393
    %508 = vmatprep.subr.mxu0 0.0
    %509 = vmatpush1.msra.mxu0 %v394
    %510 = vmatprep.subr.mxu0 0.0
    %511 = vmatpush1.msra.mxu0 %v395
    %512 = vmatprep.subr.mxu0 0.0
    %513 = vmatpush1.msra.mxu0 %v396
    %514 = vmatprep.subr.mxu0 0.0
    %515 = vmatpush1.msra.mxu0 %v397
    %516 = vmatprep.subr.mxu0 0.0
    %517 = vmatpush1.msra.mxu0 %v398
    %518 = vmatprep.subr.mxu0 0.0
    %519 = vmatpush1.msra.mxu0 %v399
    %520 = vmatprep.subr.mxu0 0.0
    %521 = vmatpush1.msra.mxu0 %v400
    %522 = vmatprep.subr.mxu0 0.0
    %523 = vmatpush1.msra.mxu0 %v401
    %524 = vmatprep.subr.mxu0 0.0
    %525 = vmatpush1.msra.mxu0 %v402
    %526 = vmatprep.subr.mxu0 0.0
    %527 = vmatpush1.msra.mxu0 %v403
    %528 = vmatprep.subr.mxu0 0.0
    %529 = vmatpush1.msra.mxu0 %v404
    %530 = vmatprep.subr.mxu0 0.0
    %531 = vmatpush1.msra.mxu0 %v405
    %532 = vmatprep.subr.mxu0 0.0
    %533 = vmatpush1.msra.mxu0 %v406
    %534 = vmatprep.subr.mxu0 0.0
    %535 = vmatpush1.msra.mxu0 %v407
    %536 = vmatprep.subr.mxu0 0.0
    %537 = vmatpush1.msra.mxu0 %v408
    %538 = vmatprep.subr.mxu0 0.0
    %539 = vmatpush1.msra.mxu0 %v409
    %540 = vmatprep.subr.mxu0 0.0
    %541 = vmatpush1.msra.mxu0 %v410
    %542 = vmatprep.subr.mxu0 0.0
    %543 = vmatpush1.msra.mxu0 %v411
    %544 = vmatprep.subr.mxu0 0.0
    %545 = vmatpush1.msra.mxu0 %v412
    %546 = vmatprep.subr.mxu0 0.0
    %547 = vmatpush1.msra.mxu0 %v413
    %548 = vmatprep.mubr.f32.mxu0 %v349
    %549 = vmatmul.mubr.f32.gmra.mrb[0].mxu0 %v346
    %v550 = vpop.f32.mrb[0].mxu0
    %v551 = vadd.f32 %v481, %v550
    %v552 = vpop.f32.mrb[0].mxu0
    %553 = vdwg.mxu0
    %554 = vst [vmem:[#allocation10] sm:$0xff] %v551
    // Predicated region
    $region58: #{tpu_custom_call.1} parent=1 // pred_check
      _
    $region59: #{tpu_custom_call.1} parent=1 // pred_check_branch
      %556 = sbr.rel (0) target = $region61
    $region60: #{tpu_custom_call.1} parent=1 // pred_region
      %s558 = ssub.s32 128, 128
      %559 = vsyncadd [#allocation4], %s558
      %s561 = sshll.u32 [#allocation10], 4
      %s562 = int_to_ptr.vmem [resolvable:$true] %s561
      %564 = dma.vmem_to_hbm [thread:$0]  %s562, 128, %s10, [#allocation4]
    $region61: #{tpu_custom_call.1} parent=1 // pred_fallthru
      _
    // Predicated region
    $region62: #{tpu_custom_call.1} parent=1 // pred_check
      _
    $region63: #{tpu_custom_call.1} parent=1 // pred_check_branch
      %566 = sbr.rel (0) target = $region65
    $region64: #{tpu_custom_call.1} parent=1 // pred_region
      %567 = dma.done [#allocation4], 128
    $region65: #{tpu_custom_call.1} parent=1 // pred_fallthru
      _
    %568 = vsyncpa [#allocation3], 1
    %569 = vsyncpa [#allocation6], 1
    %570 = vsyncpa [#allocation9], 1
    %571 = vsyncpa [#allocation4], 1

</llo_original>
